<compile_context>
chip_gen: v7x
topology: tpu7x:2x2x1
jax: 0.10.0
libtpu: 0.0.40
codegen_flags: <defaults>
</compile_context>

<pallas_src>
import functools
import math

import jax
import jax.numpy as jnp
from jax.experimental import pallas as pl
from jax.experimental.pallas import tpu as pltpu

UNITS = 128


def _cross_attention_kernel(x_ref, c_ref, wq_ref, wkv_ref, wo_ref, bias_ref,
                            o_ref, q_sc, m_sc, l_sc, acc_sc,
                            *, compute_dtype):
    b_blk, tq, e = x_ref.shape
    _, tk_blk, _ = c_ref.shape
    k_step = pl.program_id(1)
    n_k = pl.num_programs(1)

    # Bias slab rows (static slices of the single (8, E) tile; zero runtime cost).
    bq = bias_ref[0:1, :]
    bk = bias_ref[1:2, :]
    bv = bias_ref[2:3, :]
    bo = bias_ref[3:4, :]
    gamma = bias_ref[4:5, :]
    beta = bias_ref[5:6, :]

    @pl.when(k_step == 0)
    def _():
        # Q projection once per batch block (1/sqrt(E) folded into wq/bq by wrapper).
        x2d = x_ref[...].reshape(b_blk * tq, e).astype(compute_dtype)
        q = jnp.dot(x2d, wq_ref[...], preferred_element_type=jnp.float32) + bq
        q_sc[...] = q.reshape(b_blk, tq, e).astype(compute_dtype)
        m_sc[...] = jnp.full_like(m_sc, -jnp.inf)
        l_sc[...] = jnp.zeros_like(l_sc)
        acc_sc[...] = jnp.zeros_like(acc_sc)

    # --- fused K|V projection for this Tk block: one (b_blk*tk, E) x (E, 2E) matmul ---
    c2d = c_ref[...].reshape(b_blk * tk_blk, e).astype(compute_dtype)
    kv = jnp.dot(c2d, wkv_ref[...],
                 preferred_element_type=jnp.float32).reshape(b_blk, tk_blk, 2 * e)
    k = (kv[:, :, :e] + bk).astype(compute_dtype)
    v = (kv[:, :, e:] + bv).astype(compute_dtype)

    # --- online-softmax attention update (no .T / no full-Tk score tensor) ---
    s = jnp.einsum("bqd,bkd->bqk", q_sc[...], k,
                   preferred_element_type=jnp.float32)          # (b_blk, Tq, tk_blk)
    m_prev = m_sc[...]
    m_new = jnp.maximum(m_prev, jnp.max(s, axis=-1, keepdims=True))
    alpha = jnp.exp(m_prev - m_new)
    p = jnp.exp(s - m_new)
    l_sc[...] = alpha * l_sc[...] + jnp.sum(p, axis=-1, keepdims=True)
    acc_sc[...] = alpha * acc_sc[...] + jnp.einsum(
        "bqk,bkd->bqd", p.astype(compute_dtype), v,
        preferred_element_type=jnp.float32)
    m_sc[...] = m_new

    @pl.when(k_step == n_k - 1)
    def _():
        if jnp.dtype(compute_dtype) == jnp.dtype(jnp.float32):
            inv_l = 1.0 / l_sc[...]                      # exact on verification path
        else:
            inv_l = pl.reciprocal(l_sc[...], approx=True)  # EUP slot, bf16 path
        attn = acc_sc[...] * inv_l                       # (b_blk, Tq, E) f32

        # --- output projection ---
        attn2d = attn.reshape(b_blk * tq, e).astype(compute_dtype)
        attn_out = (jnp.dot(attn2d, wo_ref[...],
                            preferred_element_type=jnp.float32)
                    + bo).reshape(b_blk, tq, e)

        # --- residual add + LayerNorm over last dim (f32) ---
        y = x_ref[...].astype(jnp.float32) + attn_out
        mean = jnp.mean(y, axis=-1, keepdims=True)
        centered = y - mean
        var = jnp.mean(centered * centered, axis=-1, keepdims=True)
        inv_std = jax.lax.rsqrt(var + 1e-5)
        o_ref[...] = (centered * inv_std * gamma + beta).astype(o_ref.dtype)


def _tpu_hw_info():
    """(physical_vmem_bytes, num_tensorcores) with conservative fallbacks."""
    vmem_bytes = 128 * 1024 * 1024
    num_cores = 1
    try:
        info = pltpu.get_tpu_info()
        vmem_bytes = int(getattr(info, "vmem_capacity_bytes", vmem_bytes))
    except Exception:
        pass
    try:
        kind = jax.devices()[0].device_kind.lower()
        if "v7" in kind:
            num_cores = 2
            vmem_bytes = min(vmem_bytes, 64 * 1024 * 1024)
    except Exception:
        pass
    return vmem_bytes, num_cores


def _vmem_block_bytes(b_blk, tk_blk, tq, e, in_isz, out_isz, cd_isz):
    """VMEM footprint estimate for one grid step, incl. in-kernel intermediates."""
    f32 = 4
    mq = b_blk * tq
    mk = b_blk * tk_blk
    # double-buffered pipeline tiles (x, ctx, out)
    tiles = 2 * (mq * e * in_isz + mk * e * in_isz + mq * e * out_isz)
    # weights + bias slab (constant block index, still double-buffered, tiny)
    weights = 2 * (2 * e * e * cd_isz + e * 2 * e * cd_isz + 8 * e * f32)
    # persistent scratch (q, acc, m, l -- m/l pad to 128 lanes)
    scratch = mq * e * cd_isz + mq * e * f32 + 2 * mq * 128 * f32
    # in-kernel intermediates (rough simultaneous-live upper bound)
    inter = (mq * e * (f32 + cd_isz)                       # q f32 + x cast (step 0)
             + mk * 2 * e * f32                            # kv f32
             + mk * e * 2 * cd_isz                         # k, v casts
             + b_blk * tq * tk_blk * (2 * f32 + cd_isz)    # s, p, p cast
             + mq * e * 3 * f32)                           # attn / attn_out / y
    return tiles + weights + scratch + inter


def _pick_tk_block(Tk, tk_cap=512):
    """Full Tk when small; otherwise largest 8-multiple divisor of Tk <= tk_cap."""
    if Tk <= tk_cap:
        return Tk
    best = None
    for d in range(8, tk_cap + 1, 8):
        if Tk % d == 0:
            best = d
    # TODO(synk): if Tk has no small 8-multiple divisor, pad Tk in the wrapper and
    # mask the tail block instead of falling back to full Tk.
    return best if best is not None else Tk


def _pick_batch_block(B, Tq, tk_blk, E, in_isz, out_isz, cd_isz,
                      vmem_budget, num_cores, target_rows=512):
    divisors = [d for d in range(1, B + 1) if B % d == 0]
    # Prefer sublane-aligned tall-M reshapes ((d*Tq) % 8 == 0) when available.
    aligned = [d for d in divisors if (d * Tq) % 8 == 0]
    cand = aligned if aligned else divisors
    fitting = [d for d in cand
               if _vmem_block_bytes(d, tk_blk, Tq, E, in_isz, out_isz, cd_isz)
               <= vmem_budget] or [1]

    if num_cores >= 2 and B >= 2:
        # v7x: keep >= num_cores steps along the "parallel" batch axis.
        multi = [d for d in fitting if B // d >= num_cores]
        if multi:
            for d in multi:
                if d * Tq >= target_rows:
                    return d
            return multi[-1]
    # Single TensorCore (v5e / v6e): biggest block that fits = fewest grid steps.
    return fitting[-1]


def cross_attention(input_ids, context, params, *, compute_dtype=jnp.bfloat16,
                    out_dtype=None, target_rows=512):
    """input_ids: (B, Tq, E), context: (B, Tk, E) -> (B, Tq, E)."""
    B, Tq, E = input_ids.shape
    Bc, Tk, Ec = context.shape
    assert E == UNITS and Ec == UNITS and Bc == B
    out_dtype = input_ids.dtype if out_dtype is None else out_dtype

    # Constant-fold the attention scale into the Q projection; fuse K|V weights;
    # pack all (1, E) vectors into one (8, E) slab (one padded tile / one DMA).
    scale = 1.0 / math.sqrt(float(E))
    wq = (params["wq"] * scale).astype(compute_dtype)
    wkv = jnp.concatenate([params["wk"], params["wv"]], axis=1).astype(compute_dtype)
    wo = params["wo"].astype(compute_dtype)
    bias_slab = jnp.concatenate(
        [params["bq"] * scale, params["bk"], params["bv"], params["bo"],
         params["gamma"], params["beta"], jnp.zeros((2, E), jnp.float32)],
        axis=0)                                                  # (8, E) f32

    vmem_phys, num_cores = _tpu_hw_info()
    vmem_limit = min(int(0.75 * vmem_phys), 96 * 1024 * 1024)
    vmem_budget = int(0.6 * vmem_limit)

    cd_isz = jnp.dtype(compute_dtype).itemsize
    in_isz = jnp.dtype(input_ids.dtype).itemsize
    out_isz = jnp.dtype(out_dtype).itemsize

    tk_blk = _pick_tk_block(Tk)
    b_blk = _pick_batch_block(B, Tq, tk_blk, E, in_isz, out_isz, cd_isz,
                              vmem_budget, num_cores, target_rows)
    grid = (B // b_blk, Tk // tk_blk)

    flops = B * (4 * Tq * E * E + 4 * Tk * E * E + 4 * Tq * Tk * E)
    bytes_accessed = (B * Tq * E * in_isz + B * Tk * E * in_isz
                      + B * Tq * E * out_isz + 4 * E * E * cd_isz + 8 * E * 4)
    cost = pl.CostEstimate(flops=flops, transcendentals=B * Tq * Tk,
                           bytes_accessed=bytes_accessed)

    kernel = functools.partial(_cross_attention_kernel, compute_dtype=compute_dtype)

    return pl.pallas_call(
        kernel,
        out_shape=jax.ShapeDtypeStruct((B, Tq, E), out_dtype),
        grid_spec=pltpu.PrefetchScalarGridSpec(
            num_scalar_prefetch=0,
            grid=grid,
            in_specs=[
                pl.BlockSpec((b_blk, Tq, E), lambda b, k: (b, 0, 0)),      # input_ids
                pl.BlockSpec((b_blk, tk_blk, E), lambda b, k: (b, k, 0)),  # context
                pl.BlockSpec((E, E), lambda b, k: (0, 0)),                 # wq
                pl.BlockSpec((E, 2 * E), lambda b, k: (0, 0)),             # wkv
                pl.BlockSpec((E, E), lambda b, k: (0, 0)),                 # wo
                pl.BlockSpec((8, E), lambda b, k: (0, 0)),                 # bias slab
            ],
            out_specs=pl.BlockSpec((b_blk, Tq, E), lambda b, k: (b, 0, 0)),
            scratch_shapes=[
                pltpu.VMEM((b_blk, Tq, E), compute_dtype),    # q
                pltpu.VMEM((b_blk, Tq, 1), jnp.float32),      # m (online softmax max)
                pltpu.VMEM((b_blk, Tq, 1), jnp.float32),      # l (online softmax sum)
                pltpu.VMEM((b_blk, Tq, E), jnp.float32),      # acc
            ]),
        compiler_params=pltpu.CompilerParams(
            dimension_semantics=("parallel", "arbitrary"),
            vmem_limit_bytes=vmem_limit),
        cost_estimate=cost,
    )(input_ids, context, wq, wkv, wo, bias_slab)


def init_params(key, units=UNITS):
    # Deterministic synthetic init. Weights are stored already transposed so the
    # kernel computes x @ W (equivalent to torch's x @ W_torch.T).
    ks = jax.random.split(key, 4)
    scale = 1.0 / math.sqrt(units)
    return {
        "wq": jax.random.uniform(ks[0], (units, units), jnp.float32, -scale, scale),
        "wk": jax.random.uniform(ks[1], (units, units), jnp.float32, -scale, scale),
        "wv": jax.random.uniform(ks[2], (units, units), jnp.float32, -scale, scale),
        "wo": jax.random.uniform(ks[3], (units, units), jnp.float32, -scale, scale),
        "bq": jnp.zeros((1, units), jnp.float32),
        "bk": jnp.zeros((1, units), jnp.float32),
        "bv": jnp.zeros((1, units), jnp.float32),
        "bo": jnp.zeros((1, units), jnp.float32),
        "gamma": jnp.ones((1, units), jnp.float32),
        "beta": jnp.zeros((1, units), jnp.float32),
    }


def _reference(input_ids, context, params):
    # Pure-JAX f32 reference for correctness check.
    q = input_ids @ params["wq"] + params["bq"][0]
    k = context @ params["wk"] + params["bk"][0]
    v = context @ params["wv"] + params["bv"][0]
    s = jnp.einsum("bqd,bkd->bqk", q, k) / math.sqrt(UNITS)
    p = jax.nn.softmax(s, axis=-1)
    attn = jnp.einsum("bqk,bkd->bqd", p, v) @ params["wo"] + params["bo"][0]
    y = input_ids + attn
    mean = jnp.mean(y, axis=-1, keepdims=True)
    var = jnp.var(y, axis=-1, keepdims=True)
    return (y - mean) / jnp.sqrt(var + 1e-5) * params["gamma"][0] + params["beta"][0]


if __name__ == "__main__":
    key = jax.random.PRNGKey(0)
    k_in, k_ctx, k_par = jax.random.split(key, 3)

    B, Tq, Tk = 2, 8, 8
    input_ids = jax.random.normal(k_in, (B, Tq, UNITS), jnp.float32)
    context = jax.random.normal(k_ctx, (B, Tk, UNITS), jnp.float32)
    params = init_params(k_par)

    ref = _reference(input_ids, context, params)

    # f32 MXU path: tight check of the fused kernel semantics (exact softmax recip).
    out_f32 = jax.block_until_ready(
        cross_attention(input_ids, context, params, compute_dtype=jnp.float32))
    assert out_f32.shape == (B, Tq, UNITS)
    assert jnp.allclose(out_f32, ref, atol=5e-3, rtol=5e-3), "f32 kernel mismatch"

    # Default bf16 MXU path: looser tolerance due to bf16 input quantization.
    out_bf16 = jax.block_until_ready(cross_attention(input_ids, context, params))
    assert out_bf16.shape == (B, Tq, UNITS)
    assert jnp.allclose(out_bf16, ref, atol=5e-2, rtol=5e-2), "bf16 kernel mismatch"

    print("KERNEL_OK")
</pallas_src>

<mosaic_0001>
module attributes {stable_mosaic.version = 11 : i64} {
  func.func @_cross_attention_kernel(%arg0: i32, %arg1: i32, %arg2: memref<2x8x128xf32, #tpu.memory_space<vmem>>, %arg3: memref<2x8x128xf32, #tpu.memory_space<vmem>>, %arg4: memref<128x128xf32, #tpu.memory_space<vmem>>, %arg5: memref<128x256xf32, #tpu.memory_space<vmem>>, %arg6: memref<128x128xf32, #tpu.memory_space<vmem>>, %arg7: memref<8x128xf32, #tpu.memory_space<vmem>>, %arg8: memref<2x8x128xf32, #tpu.memory_space<vmem>>, %arg9: memref<2x8x128xf32, #tpu.memory_space<vmem>>, %arg10: memref<2x8x1xf32, #tpu.memory_space<vmem>>, %arg11: memref<2x8x1xf32, #tpu.memory_space<vmem>>, %arg12: memref<2x8x128xf32, #tpu.memory_space<vmem>>) attributes {dimension_semantics = [#tpu.dimension_semantics<parallel>, #tpu.dimension_semantics<arbitrary>], iteration_bounds = array<i64: 1, 1>, scalar_prefetch = 0 : i64, scratch_operands = 4 : i64, tpu.core_type = #tpu.core_type<tc>, window_params = [{transform_indices = @transform_0, window_bounds = array<i64: 2, 8, 128>}, {transform_indices = @transform_1, window_bounds = array<i64: 2, 8, 128>}, {pipeline_mode = #tpu.pipeline_mode<synchronous>, transform_indices = @transform_2, window_bounds = array<i64: 128, 128>}, {pipeline_mode = #tpu.pipeline_mode<synchronous>, transform_indices = @transform_3, window_bounds = array<i64: 128, 256>}, {pipeline_mode = #tpu.pipeline_mode<synchronous>, transform_indices = @transform_4, window_bounds = array<i64: 128, 128>}, {pipeline_mode = #tpu.pipeline_mode<synchronous>, transform_indices = @transform_5, window_bounds = array<i64: 8, 128>}, {transform_indices = @transform_6, window_bounds = array<i64: 2, 8, 128>}]} {
    %c0 = arith.constant 0 : index
    %c0_0 = arith.constant 0 : index
    %0 = vector.load %arg7[%c0, %c0_0] : memref<8x128xf32, #tpu.memory_space<vmem>>, vector<1x128xf32>
    %c1 = arith.constant 1 : index
    %c0_1 = arith.constant 0 : index
    %1 = vector.load %arg7[%c1, %c0_1] : memref<8x128xf32, #tpu.memory_space<vmem>>, vector<1x128xf32>
    %c2 = arith.constant 2 : index
    %c0_2 = arith.constant 0 : index
    %2 = vector.load %arg7[%c2, %c0_2] : memref<8x128xf32, #tpu.memory_space<vmem>>, vector<1x128xf32>
    %c3 = arith.constant 3 : index
    %c0_3 = arith.constant 0 : index
    %3 = vector.load %arg7[%c3, %c0_3] : memref<8x128xf32, #tpu.memory_space<vmem>>, vector<1x128xf32>
    %c4 = arith.constant 4 : index
    %c0_4 = arith.constant 0 : index
    %4 = vector.load %arg7[%c4, %c0_4] : memref<8x128xf32, #tpu.memory_space<vmem>>, vector<1x128xf32>
    %c5 = arith.constant 5 : index
    %c0_5 = arith.constant 0 : index
    %5 = vector.load %arg7[%c5, %c0_5] : memref<8x128xf32, #tpu.memory_space<vmem>>, vector<1x128xf32>
    %c0_i32 = arith.constant 0 : i32
    %6 = arith.cmpi eq, %arg1, %c0_i32 : i32
    %7 = arith.extui %6 : i1 to i32
    %c0_i32_6 = arith.constant 0 : i32
    %8 = arith.cmpi ne, %7, %c0_i32_6 : i32
    scf.if %8 {
      %c0_39 = arith.constant 0 : index
      %c0_40 = arith.constant 0 : index
      %c0_41 = arith.constant 0 : index
      %49 = vector.load %arg2[%c0_39, %c0_40, %c0_41] : memref<2x8x128xf32, #tpu.memory_space<vmem>>, vector<2x8x128xf32>
      %50 = vector.shape_cast %49 : vector<2x8x128xf32> to vector<16x128xf32>
      %c0_42 = arith.constant 0 : index
      %c0_43 = arith.constant 0 : index
      %51 = vector.load %arg4[%c0_42, %c0_43] : memref<128x128xf32, #tpu.memory_space<vmem>>, vector<128x128xf32>
      %cst_44 = arith.constant dense<0.000000e+00> : vector<16x128xf32>
      %52 = tpu.matmul %50, %51, %cst_44 {dimension_numbers = #tpu.dot_dimension_numbers<[1], [0], [0], [1], [0, 0, 1, 1], [], []>} : vector<16x128xf32>, vector<128x128xf32>, vector<16x128xf32> -> vector<16x128xf32>
      %53 = vector.broadcast %0 : vector<1x128xf32> to vector<16x128xf32>
      %54 = arith.addf %52, %53 : vector<16x128xf32>
      %55 = vector.shape_cast %54 : vector<16x128xf32> to vector<2x8x128xf32>
      %c0_45 = arith.constant 0 : index
      %c0_46 = arith.constant 0 : index
      %c0_47 = arith.constant 0 : index
      %56 = vector.load %arg9[%c0_45, %c0_46, %c0_47] : memref<2x8x128xf32, #tpu.memory_space<vmem>>, vector<2x8x128xf32>
      tpu.vector_store %arg9[%c0_45, %c0_46, %c0_47], %55 {strides = array<i32>} : memref<2x8x128xf32, #tpu.memory_space<vmem>>, vector<2x8x128xf32>,
      %cst_48 = arith.constant 0xFF800000 : f32
      %57 = vector.broadcast %cst_48 : f32 to vector<2x8x1xf32>
      %c0_49 = arith.constant 0 : index
      %c0_50 = arith.constant 0 : index
      %c0_51 = arith.constant 0 : index
      %58 = vector.load %arg10[%c0_49, %c0_50, %c0_51] : memref<2x8x1xf32, #tpu.memory_space<vmem>>, vector<2x8x1xf32>
      tpu.vector_store %arg10[%c0_49, %c0_50, %c0_51], %57 {strides = array<i32>} : memref<2x8x1xf32, #tpu.memory_space<vmem>>, vector<2x8x1xf32>,
      %cst_52 = arith.constant 0.000000e+00 : f32
      %59 = vector.broadcast %cst_52 : f32 to vector<2x8x1xf32>
      %c0_53 = arith.constant 0 : index
      %c0_54 = arith.constant 0 : index
      %c0_55 = arith.constant 0 : index
      %60 = vector.load %arg11[%c0_53, %c0_54, %c0_55] : memref<2x8x1xf32, #tpu.memory_space<vmem>>, vector<2x8x1xf32>
      tpu.vector_store %arg11[%c0_53, %c0_54, %c0_55], %59 {strides = array<i32>} : memref<2x8x1xf32, #tpu.memory_space<vmem>>, vector<2x8x1xf32>,
      %cst_56 = arith.constant 0.000000e+00 : f32
      %61 = vector.broadcast %cst_56 : f32 to vector<2x8x128xf32>
      %c0_57 = arith.constant 0 : index
      %c0_58 = arith.constant 0 : index
      %c0_59 = arith.constant 0 : index
      %62 = vector.load %arg12[%c0_57, %c0_58, %c0_59] : memref<2x8x128xf32, #tpu.memory_space<vmem>>, vector<2x8x128xf32>
      tpu.vector_store %arg12[%c0_57, %c0_58, %c0_59], %61 {strides = array<i32>} : memref<2x8x128xf32, #tpu.memory_space<vmem>>, vector<2x8x128xf32>,
    } else {
    }
    %c0_7 = arith.constant 0 : index
    %c0_8 = arith.constant 0 : index
    %c0_9 = arith.constant 0 : index
    %9 = vector.load %arg3[%c0_7, %c0_8, %c0_9] : memref<2x8x128xf32, #tpu.memory_space<vmem>>, vector<2x8x128xf32>
    %10 = vector.shape_cast %9 : vector<2x8x128xf32> to vector<16x128xf32>
    %c0_10 = arith.constant 0 : index
    %c0_11 = arith.constant 0 : index
    %11 = vector.load %arg5[%c0_10, %c0_11] : memref<128x256xf32, #tpu.memory_space<vmem>>, vector<128x256xf32>
    %cst = arith.constant dense<0.000000e+00> : vector<16x256xf32>
    %12 = tpu.matmul %10, %11, %cst {dimension_numbers = #tpu.dot_dimension_numbers<[1], [0], [0], [1], [0, 0, 1, 1], [], []>} : vector<16x128xf32>, vector<128x256xf32>, vector<16x256xf32> -> vector<16x256xf32>
    %13 = vector.shape_cast %12 : vector<16x256xf32> to vector<2x8x256xf32>
    %14 = vector.extract_strided_slice %13 {offsets = [0, 0, 0], sizes = [2, 8, 128], strides = [1, 1, 1]} : vector<2x8x256xf32> to vector<2x8x128xf32>
    %15 = vector.shape_cast %1 : vector<1x128xf32> to vector<1x1x128xf32>
    %16 = vector.broadcast %15 : vector<1x1x128xf32> to vector<2x8x128xf32>
    %17 = arith.addf %14, %16 : vector<2x8x128xf32>
    %18 = vector.extract_strided_slice %13 {offsets = [0, 0, 128], sizes = [2, 8, 128], strides = [1, 1, 1]} : vector<2x8x256xf32> to vector<2x8x128xf32>
    %19 = vector.shape_cast %2 : vector<1x128xf32> to vector<1x1x128xf32>
    %20 = vector.broadcast %19 : vector<1x1x128xf32> to vector<2x8x128xf32>
    %21 = arith.addf %18, %20 : vector<2x8x128xf32>
    %c0_12 = arith.constant 0 : index
    %c0_13 = arith.constant 0 : index
    %c0_14 = arith.constant 0 : index
    %22 = vector.load %arg9[%c0_12, %c0_13, %c0_14] : memref<2x8x128xf32, #tpu.memory_space<vmem>>, vector<2x8x128xf32>
    "tpu.trace_start"() <{level = 10 : i32, message = "bqd,bkd->bqk"}> : () -> ()
    %cst_15 = arith.constant dense<0.000000e+00> : vector<2x8x8xf32>
    %23 = tpu.matmul %22, %17, %cst_15 {dimension_numbers = #tpu.dot_dimension_numbers<[2], [2], [1], [1], [0, 0, 0, 1, 1, 1], [0], [0]>} : vector<2x8x128xf32>, vector<2x8x128xf32>, vector<2x8x8xf32> -> vector<2x8x8xf32>
    "tpu.trace_stop"() : () -> ()
    %c0_16 = arith.constant 0 : index
    %c0_17 = arith.constant 0 : index
    %c0_18 = arith.constant 0 : index
    %24 = vector.load %arg10[%c0_16, %c0_17, %c0_18] : memref<2x8x1xf32, #tpu.memory_space<vmem>>, vector<2x8x1xf32>
    %cst_19 = arith.constant dense<0xFF800000> : vector<2x8xf32>
    %25 = vector.multi_reduction <maximumf>, %23, %cst_19 [2] : vector<2x8x8xf32> to vector<2x8xf32>
    %26 = vector.shape_cast %25 : vector<2x8xf32> to vector<2x8x1xf32>
    %27 = arith.maximumf %24, %26 : vector<2x8x1xf32>
    %28 = arith.subf %24, %27 : vector<2x8x1xf32>
    %29 = math.exp %28 : vector<2x8x1xf32>
    %30 = vector.broadcast %27 : vector<2x8x1xf32> to vector<2x8x8xf32>
    %31 = arith.subf %23, %30 : vector<2x8x8xf32>
    %32 = math.exp %31 : vector<2x8x8xf32>
    %c0_20 = arith.constant 0 : index
    %c0_21 = arith.constant 0 : index
    %c0_22 = arith.constant 0 : index
    %33 = vector.load %arg11[%c0_20, %c0_21, %c0_22] : memref<2x8x1xf32, #tpu.memory_space<vmem>>, vector<2x8x1xf32>
    %34 = arith.mulf %29, %33 : vector<2x8x1xf32>
    %cst_23 = arith.constant dense<0.000000e+00> : vector<2x8xf32>
    %35 = vector.multi_reduction <add>, %32, %cst_23 [2] : vector<2x8x8xf32> to vector<2x8xf32>
    %36 = vector.shape_cast %35 : vector<2x8xf32> to vector<2x8x1xf32>
    %37 = arith.addf %34, %36 : vector<2x8x1xf32>
    %c0_24 = arith.constant 0 : index
    %c0_25 = arith.constant 0 : index
    %c0_26 = arith.constant 0 : index
    %38 = vector.load %arg11[%c0_24, %c0_25, %c0_26] : memref<2x8x1xf32, #tpu.memory_space<vmem>>, vector<2x8x1xf32>
    tpu.vector_store %arg11[%c0_24, %c0_25, %c0_26], %37 {strides = array<i32>} : memref<2x8x1xf32, #tpu.memory_space<vmem>>, vector<2x8x1xf32>,
    %c0_27 = arith.constant 0 : index
    %c0_28 = arith.constant 0 : index
    %c0_29 = arith.constant 0 : index
    %39 = vector.load %arg12[%c0_27, %c0_28, %c0_29] : memref<2x8x128xf32, #tpu.memory_space<vmem>>, vector<2x8x128xf32>
    %40 = vector.broadcast %29 : vector<2x8x1xf32> to vector<2x8x128xf32>
    %41 = arith.mulf %40, %39 : vector<2x8x128xf32>
    "tpu.trace_start"() <{level = 10 : i32, message = "bqk,bkd->bqd"}> : () -> ()
    %cst_30 = arith.constant dense<0.000000e+00> : vector<2x8x128xf32>
    %42 = tpu.matmul %32, %21, %cst_30 {dimension_numbers = #tpu.dot_dimension_numbers<[2], [1], [1], [2], [0, 0, 0, 1, 1, 2], [0], [0]>} : vector<2x8x8xf32>, vector<2x8x128xf32>, vector<2x8x128xf32> -> vector<2x8x128xf32>
    "tpu.trace_stop"() : () -> ()
    %43 = arith.addf %41, %42 : vector<2x8x128xf32>
    %c0_31 = arith.constant 0 : index
    %c0_32 = arith.constant 0 : index
    %c0_33 = arith.constant 0 : index
    %44 = vector.load %arg12[%c0_31, %c0_32, %c0_33] : memref<2x8x128xf32, #tpu.memory_space<vmem>>, vector<2x8x128xf32>
    tpu.vector_store %arg12[%c0_31, %c0_32, %c0_33], %43 {strides = array<i32>} : memref<2x8x128xf32, #tpu.memory_space<vmem>>, vector<2x8x128xf32>,
    %c0_34 = arith.constant 0 : index
    %c0_35 = arith.constant 0 : index
    %c0_36 = arith.constant 0 : index
    %45 = vector.load %arg10[%c0_34, %c0_35, %c0_36] : memref<2x8x1xf32, #tpu.memory_space<vmem>>, vector<2x8x1xf32>
    tpu.vector_store %arg10[%c0_34, %c0_35, %c0_36], %27 {strides = array<i32>} : memref<2x8x1xf32, #tpu.memory_space<vmem>>, vector<2x8x1xf32>,
    %c0_i32_37 = arith.constant 0 : i32
    %46 = arith.cmpi eq, %arg1, %c0_i32_37 : i32
    %47 = arith.extui %46 : i1 to i32
    %c0_i32_38 = arith.constant 0 : i32
    %48 = arith.cmpi ne, %47, %c0_i32_38 : i32
    scf.if %48 {
      %c0_39 = arith.constant 0 : index
      %c0_40 = arith.constant 0 : index
      %c0_41 = arith.constant 0 : index
      %49 = vector.load %arg11[%c0_39, %c0_40, %c0_41] : memref<2x8x1xf32, #tpu.memory_space<vmem>>, vector<2x8x1xf32>
      %cst_42 = arith.constant 1.000000e+00 : f32
      %50 = vector.broadcast %cst_42 : f32 to vector<2x8x1xf32>
      %51 = arith.divf %50, %49 : vector<2x8x1xf32>
      %c0_43 = arith.constant 0 : index
      %c0_44 = arith.constant 0 : index
      %c0_45 = arith.constant 0 : index
      %52 = vector.load %arg12[%c0_43, %c0_44, %c0_45] : memref<2x8x128xf32, #tpu.memory_space<vmem>>, vector<2x8x128xf32>
      %53 = vector.broadcast %51 : vector<2x8x1xf32> to vector<2x8x128xf32>
      %54 = arith.mulf %52, %53 : vector<2x8x128xf32>
      %55 = vector.shape_cast %54 : vector<2x8x128xf32> to vector<16x128xf32>
      %c0_46 = arith.constant 0 : index
      %c0_47 = arith.constant 0 : index
      %56 = vector.load %arg6[%c0_46, %c0_47] : memref<128x128xf32, #tpu.memory_space<vmem>>, vector<128x128xf32>
      %cst_48 = arith.constant dense<0.000000e+00> : vector<16x128xf32>
      %57 = tpu.matmul %55, %56, %cst_48 {dimension_numbers = #tpu.dot_dimension_numbers<[1], [0], [0], [1], [0, 0, 1, 1], [], []>} : vector<16x128xf32>, vector<128x128xf32>, vector<16x128xf32> -> vector<16x128xf32>
      %58 = vector.broadcast %3 : vector<1x128xf32> to vector<16x128xf32>
      %59 = arith.addf %57, %58 : vector<16x128xf32>
      %60 = vector.shape_cast %59 : vector<16x128xf32> to vector<2x8x128xf32>
      %c0_49 = arith.constant 0 : index
      %c0_50 = arith.constant 0 : index
      %c0_51 = arith.constant 0 : index
      %61 = vector.load %arg2[%c0_49, %c0_50, %c0_51] : memref<2x8x128xf32, #tpu.memory_space<vmem>>, vector<2x8x128xf32>
      %62 = arith.addf %61, %60 : vector<2x8x128xf32>
      %cst_52 = arith.constant dense<0.000000e+00> : vector<2x8xf32>
      %63 = vector.multi_reduction <add>, %62, %cst_52 [2] : vector<2x8x128xf32> to vector<2x8xf32>
      %64 = vector.shape_cast %63 : vector<2x8xf32> to vector<2x8x1xf32>
      %cst_53 = arith.constant 1.280000e+02 : f32
      %65 = vector.broadcast %cst_53 : f32 to vector<2x8x1xf32>
      %66 = arith.divf %64, %65 : vector<2x8x1xf32>
      %67 = vector.broadcast %66 : vector<2x8x1xf32> to vector<2x8x128xf32>
      %68 = arith.subf %62, %67 : vector<2x8x128xf32>
      %69 = arith.mulf %68, %68 : vector<2x8x128xf32>
      %cst_54 = arith.constant dense<0.000000e+00> : vector<2x8xf32>
      %70 = vector.multi_reduction <add>, %69, %cst_54 [2] : vector<2x8x128xf32> to vector<2x8xf32>
      %71 = vector.shape_cast %70 : vector<2x8xf32> to vector<2x8x1xf32>
      %cst_55 = arith.constant 1.280000e+02 : f32
      %72 = vector.broadcast %cst_55 : f32 to vector<2x8x1xf32>
      %73 = arith.divf %71, %72 : vector<2x8x1xf32>
      %cst_56 = arith.constant 9.99999974E-6 : f32
      %74 = vector.broadcast %cst_56 : f32 to vector<2x8x1xf32>
      %75 = arith.addf %73, %74 : vector<2x8x1xf32>
      %76 = math.rsqrt %75 : vector<2x8x1xf32>
      %77 = vector.broadcast %76 : vector<2x8x1xf32> to vector<2x8x128xf32>
      %78 = arith.mulf %68, %77 : vector<2x8x128xf32>
      %79 = vector.shape_cast %4 : vector<1x128xf32> to vector<1x1x128xf32>
      %80 = vector.broadcast %79 : vector<1x1x128xf32> to vector<2x8x128xf32>
      %81 = arith.mulf %78, %80 : vector<2x8x128xf32>
      %82 = vector.shape_cast %5 : vector<1x128xf32> to vector<1x1x128xf32>
      %83 = vector.broadcast %82 : vector<1x1x128xf32> to vector<2x8x128xf32>
      %84 = arith.addf %81, %83 : vector<2x8x128xf32>
      %c0_57 = arith.constant 0 : index
      %c0_58 = arith.constant 0 : index
      %c0_59 = arith.constant 0 : index
      %85 = vector.load %arg8[%c0_57, %c0_58, %c0_59] : memref<2x8x128xf32, #tpu.memory_space<vmem>>, vector<2x8x128xf32>
      tpu.vector_store %arg8[%c0_57, %c0_58, %c0_59], %84 {strides = array<i32>} : memref<2x8x128xf32, #tpu.memory_space<vmem>>, vector<2x8x128xf32>,
    } else {
    }
    return
  }
  func.func @transform_0(%arg0: i32, %arg1: i32) -> (i32, i32, i32) {
    %c0_i32 = arith.constant 0 : i32
    %c0_i32_0 = arith.constant 0 : i32
    %c0_i32_1 = arith.constant 0 : i32
    return %arg0, %c0_i32, %c0_i32_0 : i32, i32, i32
  }
  func.func @transform_1(%arg0: i32, %arg1: i32) -> (i32, i32, i32) {
    %c0_i32 = arith.constant 0 : i32
    %c0_i32_0 = arith.constant 0 : i32
    return %arg0, %arg1, %c0_i32 : i32, i32, i32
  }
  func.func @transform_2(%arg0: i32, %arg1: i32) -> (i32, i32) {
    %c0_i32 = arith.constant 0 : i32
    %c0_i32_0 = arith.constant 0 : i32
    %c0_i32_1 = arith.constant 0 : i32
    return %c0_i32, %c0_i32_0 : i32, i32
  }
  func.func @transform_3(%arg0: i32, %arg1: i32) -> (i32, i32) {
    %c0_i32 = arith.constant 0 : i32
    %c0_i32_0 = arith.constant 0 : i32
    %c0_i32_1 = arith.constant 0 : i32
    return %c0_i32, %c0_i32_0 : i32, i32
  }
  func.func @transform_4(%arg0: i32, %arg1: i32) -> (i32, i32) {
    %c0_i32 = arith.constant 0 : i32
    %c0_i32_0 = arith.constant 0 : i32
    %c0_i32_1 = arith.constant 0 : i32
    return %c0_i32, %c0_i32_0 : i32, i32
  }
  func.func @transform_5(%arg0: i32, %arg1: i32) -> (i32, i32) {
    %c0_i32 = arith.constant 0 : i32
    %c0_i32_0 = arith.constant 0 : i32
    %c0_i32_1 = arith.constant 0 : i32
    return %c0_i32, %c0_i32_0 : i32, i32
  }
  func.func @transform_6(%arg0: i32, %arg1: i32) -> (i32, i32, i32) {
    %c0_i32 = arith.constant 0 : i32
    %c0_i32_0 = arith.constant 0 : i32
    %c0_i32_1 = arith.constant 0 : i32
    return %arg0, %c0_i32, %c0_i32_0 : i32, i32, i32
  }
}

</mosaic_0001>

<llo_original>
// kernel: tpu_custom_call.1
$region0: #{tpu_custom_call.1}
  #allocation0 [shape = 'u32[]', space=smem, size = 0x4, offset = 0x4, fixed_abs, tag = 'smem constant byte address 0x4 - core index']
  #allocation1 [shape = 'u32[144,128]{1,0:T(1,128)}', space=vmem, size = 0x12000, scoped, tag = 'internal scratch']
  #allocation2 [shape = 'f32[2,8,128]{2,1,0:T(8,128)}', space=vmem, size = 0x2000, scoped, tag = 'scratch operand']
  #allocation3 [shape = 'f32[2,8,1]{2,1,0:T(8,128)}', space=vmem, size = 0x2000, scoped, tag = 'scratch operand']
  #allocation4 [shape = 'f32[2,8,1]{2,1,0:T(8,128)}', space=vmem, size = 0x2000, scoped, tag = 'scratch operand']
  #allocation5 [shape = 'f32[2,8,128]{2,1,0:T(8,128)}', space=vmem, size = 0x2000, scoped, tag = 'scratch operand']
  %s0 = inlined_call_operand.hbm [shape: f32[2,8,128], index: 0, kind: input, shape index: {}]
  %s1 = inlined_call_operand.hbm [shape: f32[2,8,128], index: 1, kind: input, shape index: {}]
  %s2 = inlined_call_operand.hbm [shape: f32[128,128], index: 2, kind: input, shape index: {}]
  %s3 = inlined_call_operand.hbm [shape: f32[128,256], index: 3, kind: input, shape index: {}]
  %s4 = inlined_call_operand.hbm [shape: f32[128,128], index: 4, kind: input, shape index: {}]
  %s5 = inlined_call_operand.hbm [shape: f32[8,128], index: 5, kind: input, shape index: {}]
  %s6 = inlined_call_operand.hbm [shape: f32[2,8,128], index: 6, kind: output, shape index: {}]
  %s7 = sld [smem:[#allocation0]]
  $region66: #{tpu_custom_call.1} parent=0
    _
  %s9 = ssub.s32 1, %s7
  %s10 = scalar_select 0, %s9, %s7
  $region1: #{tpu_custom_call.1} parent=0
    #allocation6 [shape = 'u8[8192]{0}', space=vmem, size = 0x2000, scoped, tag = 'input window, operand 0, single buffered']
    #allocation7 [shape = 's32[1]{0}', space=sflag, size = 0x4, scoped, tag = 'scoped memory for tpu_custom_call.1']
    #allocation8 [shape = 's32[1]{0}', space=sflag, size = 0x4, scoped, tag = 'scoped memory for tpu_custom_call.1']
    #allocation9 [shape = 'u8[8192]{0}', space=vmem, size = 0x2000, scoped, tag = 'input window, operand 1, single buffered']
    #allocation10 [shape = 's32[1]{0}', space=sflag, size = 0x4, scoped, tag = 'scoped memory for tpu_custom_call.1']
    #allocation11 [shape = 'u8[65536]{0}', space=vmem, size = 0x10000, scoped, tag = 'input window, operand 2, single buffered']
    #allocation12 [shape = 'u8[131072]{0}', space=vmem, size = 0x20000, scoped, tag = 'input window, operand 3, single buffered']
    #allocation13 [shape = 's32[1]{0}', space=sflag, size = 0x4, scoped, tag = 'scoped memory for tpu_custom_call.1']
    #allocation14 [shape = 'u8[65536]{0}', space=vmem, size = 0x10000, scoped, tag = 'input window, operand 4, single buffered']
    #allocation15 [shape = 'u8[4096]{0}', space=vmem, size = 0x1000, scoped, tag = 'input window, operand 5, single buffered']
    #allocation16 [shape = 's32[1]{0}', space=sflag, size = 0x4, scoped, tag = 'scoped memory for tpu_custom_call.1']
    #allocation17 [shape = 'u8[8192]{0}', space=vmem, size = 0x2000, scoped, tag = 'output window, operand 0, single buffered']
    %11 = vsyncpa [#allocation7], 0
    %12 = vsyncpa [#allocation10], 0
    %13 = vsyncpa [#allocation13], 0
    %14 = vsyncpa [#allocation16], 0
    %15 = vsyncpa [#allocation8], 0
    // Predicated region
    $region2: #{tpu_custom_call.1} parent=1 // pred_check
      _
    $region3: #{tpu_custom_call.1} parent=1 // pred_check_branch
      %17 = sbr.rel (0) target = $region5
    $region4: #{tpu_custom_call.1} parent=1 // pred_region
      %s19 = ssub.s32 256, 256
      %20 = vsyncadd [#allocation7], %s19
      %s21 = sshll.u32 [#allocation6], 4
      %s22 = int_to_ptr.vmem [resolvable:$true] %s21
      %27 = dma.hbm_to_vmem [thread:$0]  %s0, 256, %s22, [#allocation7], 128, 128, 8
    $region5: #{tpu_custom_call.1} parent=1 // pred_fallthru
      _
    // Predicated region
    $region6: #{tpu_custom_call.1} parent=1 // pred_check
      _
    $region7: #{tpu_custom_call.1} parent=1 // pred_check_branch
      %29 = sbr.rel (0) target = $region9
    $region8: #{tpu_custom_call.1} parent=1 // pred_region
      %s31 = ssub.s32 256, 256
      %32 = vsyncadd [#allocation10], %s31
      %s33 = sshll.u32 [#allocation9], 4
      %s34 = int_to_ptr.vmem [resolvable:$true] %s33
      %39 = dma.hbm_to_vmem [thread:$0]  %s1, 256, %s34, [#allocation10], 128, 128, 8
    $region9: #{tpu_custom_call.1} parent=1 // pred_fallthru
      _
    // Predicated region
    $region10: #{tpu_custom_call.1} parent=1 // pred_check
      _
    $region11: #{tpu_custom_call.1} parent=1 // pred_check_branch
      %41 = sbr.rel (0) target = $region13
    $region12: #{tpu_custom_call.1} parent=1 // pred_region
      %s43 = ssub.s32 2048, 2048
      %44 = vsyncadd [#allocation10], %s43
      %s45 = sshll.u32 [#allocation11], 4
      %s46 = int_to_ptr.vmem [resolvable:$true] %s45
      %51 = dma.hbm_to_vmem [thread:$0]  %s2, 2048, %s46, [#allocation10], 128, 128, 8
    $region13: #{tpu_custom_call.1} parent=1 // pred_fallthru
      _
    // Predicated region
    $region14: #{tpu_custom_call.1} parent=1 // pred_check
      _
    $region15: #{tpu_custom_call.1} parent=1 // pred_check_branch
      %53 = sbr.rel (0) target = $region17
    $region16: #{tpu_custom_call.1} parent=1 // pred_region
      %s55 = ssub.s32 4096, 4096
      %56 = vsyncadd [#allocation13], %s55
      %s57 = sshll.u32 [#allocation12], 4
      %s58 = int_to_ptr.vmem [resolvable:$true] %s57
      %63 = dma.hbm_to_vmem [thread:$0]  %s3, 4096, %s58, [#allocation13], 256, 256, 16
    $region17: #{tpu_custom_call.1} parent=1 // pred_fallthru
      _
    // Predicated region
    $region18: #{tpu_custom_call.1} parent=1 // pred_check
      _
    $region19: #{tpu_custom_call.1} parent=1 // pred_check_branch
      %65 = sbr.rel (0) target = $region21
    $region20: #{tpu_custom_call.1} parent=1 // pred_region
      %s67 = ssub.s32 2048, 2048
      %68 = vsyncadd [#allocation13], %s67
      %s69 = sshll.u32 [#allocation14], 4
      %s70 = int_to_ptr.vmem [resolvable:$true] %s69
      %75 = dma.hbm_to_vmem [thread:$0]  %s4, 2048, %s70, [#allocation13], 128, 128, 8
    $region21: #{tpu_custom_call.1} parent=1 // pred_fallthru
      _
    // Predicated region
    $region22: #{tpu_custom_call.1} parent=1 // pred_check
      _
    $region23: #{tpu_custom_call.1} parent=1 // pred_check_branch
      %77 = sbr.rel (0) target = $region25
    $region24: #{tpu_custom_call.1} parent=1 // pred_region
      %s79 = ssub.s32 128, 128
      %80 = vsyncadd [#allocation16], %s79
      %s82 = sshll.u32 [#allocation15], 4
      %s83 = int_to_ptr.vmem [resolvable:$true] %s82
      %85 = dma.hbm_to_vmem [thread:$0]  %s5, 128, %s83, [#allocation16]
    $region25: #{tpu_custom_call.1} parent=1 // pred_fallthru
      _
    // Predicated region
    $region26: #{tpu_custom_call.1} parent=1 // pred_check
      _
    $region27: #{tpu_custom_call.1} parent=1 // pred_check_branch
      %87 = sbr.rel (0) target = $region29
    $region28: #{tpu_custom_call.1} parent=1 // pred_region
      %88 = dma.done [#allocation7], 256
    $region29: #{tpu_custom_call.1} parent=1 // pred_fallthru
      _
    // Predicated region
    $region30: #{tpu_custom_call.1} parent=1 // pred_check
      _
    $region31: #{tpu_custom_call.1} parent=1 // pred_check_branch
      %90 = sbr.rel (0) target = $region33
    $region32: #{tpu_custom_call.1} parent=1 // pred_region
      %91 = dma.done [#allocation10], 256
    $region33: #{tpu_custom_call.1} parent=1 // pred_fallthru
      _
    // Predicated region
    $region34: #{tpu_custom_call.1} parent=1 // pred_check
      _
    $region35: #{tpu_custom_call.1} parent=1 // pred_check_branch
      %93 = sbr.rel (0) target = $region37
    $region36: #{tpu_custom_call.1} parent=1 // pred_region
      %94 = dma.done [#allocation10], 2048
    $region37: #{tpu_custom_call.1} parent=1 // pred_fallthru
      _
    // Predicated region
    $region38: #{tpu_custom_call.1} parent=1 // pred_check
      _
    $region39: #{tpu_custom_call.1} parent=1 // pred_check_branch
      %96 = sbr.rel (0) target = $region41
    $region40: #{tpu_custom_call.1} parent=1 // pred_region
      %97 = dma.done [#allocation13], 4096
    $region41: #{tpu_custom_call.1} parent=1 // pred_fallthru
      _
    // Predicated region
    $region42: #{tpu_custom_call.1} parent=1 // pred_check
      _
    $region43: #{tpu_custom_call.1} parent=1 // pred_check_branch
      %99 = sbr.rel (0) target = $region45
    $region44: #{tpu_custom_call.1} parent=1 // pred_region
      %100 = dma.done [#allocation13], 2048
    $region45: #{tpu_custom_call.1} parent=1 // pred_fallthru
      _
    // Predicated region
    $region46: #{tpu_custom_call.1} parent=1 // pred_check
      _
    $region47: #{tpu_custom_call.1} parent=1 // pred_check_branch
      %102 = sbr.rel (0) target = $region49
    $region48: #{tpu_custom_call.1} parent=1 // pred_region
      %103 = dma.done [#allocation16], 128
    $region49: #{tpu_custom_call.1} parent=1 // pred_fallthru
      _
    %v104 = vld [vmem:[#allocation15] sm:$0x1]
    %v105 = vld [vmem:[#allocation15 + $0x1] sm:$0x1]
    %v106 = vld [vmem:[#allocation15 + $0x2] sm:$0x1]
    %v107 = vld [vmem:[#allocation15 + $0x3] sm:$0x1]
    %v108 = vld [vmem:[#allocation15 + $0x4] sm:$0x1]
    %v109 = vld [vmem:[#allocation15 + $0x5] sm:$0x1]
    %p110 = scmp.eq.s32.totalorder 0, 0
    // Predicated region
    $region50: #{tpu_custom_call.1} parent=1 // pred_check
      %p111 = pneg %p110
    $region51: #{tpu_custom_call.1} parent=1 // pred_check_branch
      %113 = sbr.rel (%p111) target = $region53
    $region52: #{tpu_custom_call.1} parent=1 // pred_region
      %v114 = vld [vmem:[#allocation6] sm:$0xff]
      %v115 = vld [vmem:[#allocation6 + $0x8] sm:$0xff]
      %v116 = vld [vmem:[#allocation11] sm:$0xff]
      %v117 = vld [vmem:[#allocation11 + $0x8] sm:$0xff]
      %v118 = vld [vmem:[#allocation11 + $0x10] sm:$0xff]
      %v119 = vld [vmem:[#allocation11 + $0x18] sm:$0xff]
      %v120 = vld [vmem:[#allocation11 + $0x20] sm:$0xff]
      %v121 = vld [vmem:[#allocation11 + $0x28] sm:$0xff]
      %v122 = vld [vmem:[#allocation11 + $0x30] sm:$0xff]
      %v123 = vld [vmem:[#allocation11 + $0x38] sm:$0xff]
      %v124 = vld [vmem:[#allocation11 + $0x40] sm:$0xff]
      %v125 = vld [vmem:[#allocation11 + $0x48] sm:$0xff]
      %v126 = vld [vmem:[#allocation11 + $0x50] sm:$0xff]
      %v127 = vld [vmem:[#allocation11 + $0x58] sm:$0xff]
      %v128 = vld [vmem:[#allocation11 + $0x60] sm:$0xff]
      %v129 = vld [vmem:[#allocation11 + $0x68] sm:$0xff]
      %v130 = vld [vmem:[#allocation11 + $0x70] sm:$0xff]
      %v131 = vld [vmem:[#allocation11 + $0x78] sm:$0xff]
      %v132 = vlaneseq
      %v133 = vshrl.u32 %v132, 7
      %v134 = vsub.s32 0, %v133
      %v135 = vrot.slane %v104, %v134
      %136 = vmatprep.subr.mxu0 0.0
      %137 = vmatpush1.msra.mxu0 %v116
      %138 = vmatprep.subr.mxu0 0.0
      %139 = vmatpush1.msra.mxu0 %v117
      %140 = vmatprep.subr.mxu0 0.0
      %141 = vmatpush1.msra.mxu0 %v118
      %142 = vmatprep.subr.mxu0 0.0
      %143 = vmatpush1.msra.mxu0 %v119
      %144 = vmatprep.subr.mxu0 0.0
      %145 = vmatpush1.msra.mxu0 %v120
      %146 = vmatprep.subr.mxu0 0.0
      %147 = vmatpush1.msra.mxu0 %v121
      %148 = vmatprep.subr.mxu0 0.0
      %149 = vmatpush1.msra.mxu0 %v122
      %150 = vmatprep.subr.mxu0 0.0
      %151 = vmatpush1.msra.mxu0 %v123
      %152 = vmatprep.subr.mxu0 0.0
      %153 = vmatpush1.msra.mxu0 %v124
      %154 = vmatprep.subr.mxu0 0.0
      %155 = vmatpush1.msra.mxu0 %v125
      %156 = vmatprep.subr.mxu0 0.0
      %157 = vmatpush1.msra.mxu0 %v126
      %158 = vmatprep.subr.mxu0 0.0
      %159 = vmatpush1.msra.mxu0 %v127
      %160 = vmatprep.subr.mxu0 0.0
      %161 = vmatpush1.msra.mxu0 %v128
      %162 = vmatprep.subr.mxu0 0.0
      %163 = vmatpush1.msra.mxu0 %v129
      %164 = vmatprep.subr.mxu0 0.0
      %165 = vmatpush1.msra.mxu0 %v130
      %166 = vmatprep.subr.mxu0 0.0
      %167 = vmatpush1.msra.mxu0 %v131
      %168 = vmatprep.subr.mxu0 0.0
      %169 = vmatpush1.msra.mxu0 0.0
      %170 = vmatprep.subr.mxu0 0.0
      %171 = vmatpush1.msra.mxu0 0.0
      %172 = vmatprep.subr.mxu0 0.0
      %173 = vmatpush1.msra.mxu0 0.0
      %174 = vmatprep.subr.mxu0 0.0
      %175 = vmatpush1.msra.mxu0 0.0
      %176 = vmatprep.subr.mxu0 0.0
      %177 = vmatpush1.msra.mxu0 0.0
      %178 = vmatprep.subr.mxu0 0.0
      %179 = vmatpush1.msra.mxu0 0.0
      %180 = vmatprep.subr.mxu0 0.0
      %181 = vmatpush1.msra.mxu0 0.0
      %182 = vmatprep.subr.mxu0 0.0
      %183 = vmatpush1.msra.mxu0 0.0
      %184 = vmatprep.subr.mxu0 0.0
      %185 = vmatpush1.msra.mxu0 0.0
      %186 = vmatprep.subr.mxu0 0.0
      %187 = vmatpush1.msra.mxu0 0.0
      %188 = vmatprep.subr.mxu0 0.0
      %189 = vmatpush1.msra.mxu0 0.0
      %190 = vmatprep.subr.mxu0 0.0
      %191 = vmatpush1.msra.mxu0 0.0
      %192 = vmatprep.subr.mxu0 0.0
      %193 = vmatpush1.msra.mxu0 0.0
      %194 = vmatprep.subr.mxu0 0.0
      %195 = vmatpush1.msra.mxu0 0.0
      %196 = vmatprep.subr.mxu0 0.0
      %197 = vmatpush1.msra.mxu0 0.0
      %198 = vmatprep.subr.mxu0 0.0
      %199 = vmatpush1.msra.mxu0 0.0
      %200 = vmatprep.mubr.f32.mxu0 0.0
      %201 = vmatmul.mubr.f32.gmra.mrb[0].mxu0 %v114
      %v202 = vpop.f32.mrb[0].mxu0
      %v203 = vadd.f32 %v135, %v202
      %v204 = vpop.f32.mrb[0].mxu0
      %205 = vmatprep.mubr.f32.mxu0 0.0
      %206 = vmatmul.mubr.f32.gmra.mrb[0].mxu0 %v115
      %v207 = vpop.f32.mrb[0].mxu0
      %v208 = vadd.f32 %v135, %v207
      %v209 = vpop.f32.mrb[0].mxu0
      %210 = vdwg.mxu0
      %211 = vst [vmem:[#allocation2] sm:$0xff] %v203
      %212 = vst [vmem:[#allocation2 + $0x8] sm:$0xff] %v208
      %vm213 = vcmask 7168
      %214 = vst.msk [vmem:[#allocation3] sm:$0xff] %vm213, -inf
      %215 = vst.msk [vmem:[#allocation3 + $0x8] sm:$0xff] %vm213, -inf
      %216 = vst.msk [vmem:[#allocation4] sm:$0xff] %vm213, 0.0
      %217 = vst.msk [vmem:[#allocation4 + $0x8] sm:$0xff] %vm213, 0.0
      %218 = vst [vmem:[#allocation5] sm:$0xff] 0.0
      %219 = vst [vmem:[#allocation5 + $0x8] sm:$0xff] 0.0
    $region53: #{tpu_custom_call.1} parent=1 // pred_fallthru
      _
    %v220 = vld [vmem:[#allocation9] sm:$0xff]
    %v221 = vld [vmem:[#allocation9 + $0x8] sm:$0xff]
    %v222 = vld [vmem:[#allocation12] sm:$0xff]
    %v223 = vld [vmem:[#allocation12 + $0x8] sm:$0xff]
    %v224 = vld [vmem:[#allocation12 + $0x10] sm:$0xff]
    %v225 = vld [vmem:[#allocation12 + $0x18] sm:$0xff]
    %v226 = vld [vmem:[#allocation12 + $0x20] sm:$0xff]
    %v227 = vld [vmem:[#allocation12 + $0x28] sm:$0xff]
    %v228 = vld [vmem:[#allocation12 + $0x30] sm:$0xff]
    %v229 = vld [vmem:[#allocation12 + $0x38] sm:$0xff]
    %v230 = vld [vmem:[#allocation12 + $0x40] sm:$0xff]
    %v231 = vld [vmem:[#allocation12 + $0x48] sm:$0xff]
    %v232 = vld [vmem:[#allocation12 + $0x50] sm:$0xff]
    %v233 = vld [vmem:[#allocation12 + $0x58] sm:$0xff]
    %v234 = vld [vmem:[#allocation12 + $0x60] sm:$0xff]
    %v235 = vld [vmem:[#allocation12 + $0x68] sm:$0xff]
    %v236 = vld [vmem:[#allocation12 + $0x70] sm:$0xff]
    %v237 = vld [vmem:[#allocation12 + $0x78] sm:$0xff]
    %v238 = vld [vmem:[#allocation12 + $0x80] sm:$0xff]
    %v239 = vld [vmem:[#allocation12 + $0x88] sm:$0xff]
    %v240 = vld [vmem:[#allocation12 + $0x90] sm:$0xff]
    %v241 = vld [vmem:[#allocation12 + $0x98] sm:$0xff]
    %v242 = vld [vmem:[#allocation12 + $0xa0] sm:$0xff]
    %v243 = vld [vmem:[#allocation12 + $0xa8] sm:$0xff]
    %v244 = vld [vmem:[#allocation12 + $0xb0] sm:$0xff]
    %v245 = vld [vmem:[#allocation12 + $0xb8] sm:$0xff]
    %v246 = vld [vmem:[#allocation12 + $0xc0] sm:$0xff]
    %v247 = vld [vmem:[#allocation12 + $0xc8] sm:$0xff]
    %v248 = vld [vmem:[#allocation12 + $0xd0] sm:$0xff]
    %v249 = vld [vmem:[#allocation12 + $0xd8] sm:$0xff]
    %v250 = vld [vmem:[#allocation12 + $0xe0] sm:$0xff]
    %v251 = vld [vmem:[#allocation12 + $0xe8] sm:$0xff]
    %v252 = vld [vmem:[#allocation12 + $0xf0] sm:$0xff]
    %v253 = vld [vmem:[#allocation12 + $0xf8] sm:$0xff]
    %254 = vmatprep.subr.mxu0 %v223
    %255 = vmatpush1.msra.mxu0 %v222
    %256 = vmatprep.subr.mxu0 %v225
    %257 = vmatpush1.msra.mxu0 %v224
    %258 = vmatprep.subr.mxu0 %v227
    %259 = vmatpush1.msra.mxu0 %v226
    %260 = vmatprep.subr.mxu0 %v229
    %261 = vmatpush1.msra.mxu0 %v228
    %262 = vmatprep.subr.mxu0 %v231
    %263 = vmatpush1.msra.mxu0 %v230
    %264 = vmatprep.subr.mxu0 %v233
    %265 = vmatpush1.msra.mxu0 %v232
    %266 = vmatprep.subr.mxu0 %v235
    %267 = vmatpush1.msra.mxu0 %v234
    %268 = vmatprep.subr.mxu0 %v237
    %269 = vmatpush1.msra.mxu0 %v236
    %270 = vmatprep.subr.mxu0 %v239
    %271 = vmatpush1.msra.mxu0 %v238
    %272 = vmatprep.subr.mxu0 %v241
    %273 = vmatpush1.msra.mxu0 %v240
    %274 = vmatprep.subr.mxu0 %v243
    %275 = vmatpush1.msra.mxu0 %v242
    %276 = vmatprep.subr.mxu0 %v245
    %277 = vmatpush1.msra.mxu0 %v244
    %278 = vmatprep.subr.mxu0 %v247
    %279 = vmatpush1.msra.mxu0 %v246
    %280 = vmatprep.subr.mxu0 %v249
    %281 = vmatpush1.msra.mxu0 %v248
    %282 = vmatprep.subr.mxu0 %v251
    %283 = vmatpush1.msra.mxu0 %v250
    %284 = vmatprep.subr.mxu0 %v253
    %285 = vmatpush1.msra.mxu0 %v252
    %286 = vmatprep.subr.mxu0 0.0
    %287 = vmatpush1.msra.mxu0 0.0
    %288 = vmatprep.subr.mxu0 0.0
    %289 = vmatpush1.msra.mxu0 0.0
    %290 = vmatprep.subr.mxu0 0.0
    %291 = vmatpush1.msra.mxu0 0.0
    %292 = vmatprep.subr.mxu0 0.0
    %293 = vmatpush1.msra.mxu0 0.0
    %294 = vmatprep.subr.mxu0 0.0
    %295 = vmatpush1.msra.mxu0 0.0
    %296 = vmatprep.subr.mxu0 0.0
    %297 = vmatpush1.msra.mxu0 0.0
    %298 = vmatprep.subr.mxu0 0.0
    %299 = vmatpush1.msra.mxu0 0.0
    %300 = vmatprep.subr.mxu0 0.0
    %301 = vmatpush1.msra.mxu0 0.0
    %302 = vmatprep.subr.mxu0 0.0
    %303 = vmatpush1.msra.mxu0 0.0
    %304 = vmatprep.subr.mxu0 0.0
    %305 = vmatpush1.msra.mxu0 0.0
    %306 = vmatprep.subr.mxu0 0.0
    %307 = vmatpush1.msra.mxu0 0.0
    %308 = vmatprep.subr.mxu0 0.0
    %309 = vmatpush1.msra.mxu0 0.0
    %310 = vmatprep.subr.mxu0 0.0
    %311 = vmatpush1.msra.mxu0 0.0
    %312 = vmatprep.subr.mxu0 0.0
    %313 = vmatpush1.msra.mxu0 0.0
    %314 = vmatprep.subr.mxu0 0.0
    %315 = vmatpush1.msra.mxu0 0.0
    %316 = vmatprep.subr.mxu0 0.0
    %317 = vmatpush1.msra.mxu0 0.0
    %318 = vmatprep.mubr.f32.mxu0 0.0
    %319 = vmatmul.mubr.f32.gmra.mrb[0].mxu0 %v220
    %v320 = vpop.f32.mrb[0].mxu0
    %v321 = vadd.f32 0.0, %v320
    %v322 = vpop.f32.mrb[0].mxu0
    %v323 = vadd.f32 0.0, %v322
    %324 = vmatprep.mubr.f32.mxu0 0.0
    %325 = vmatmul.mubr.f32.gmra.mrb[0].mxu0 %v221
    %v326 = vpop.f32.mrb[0].mxu0
    %v327 = vadd.f32 0.0, %v326
    %v328 = vpop.f32.mrb[0].mxu0
    %v329 = vadd.f32 0.0, %v328
    %330 = vdwg.mxu0
    %v331 = vlaneseq
    %v332 = vshrl.u32 %v331, 7
    %v333 = vsub.s32 0, %v332
    %v334 = vrot.slane %v105, %v333
    %v335 = vadd.f32 %v321, %v334
    %v336 = vadd.f32 %v327, %v334
    %v337 = vlaneseq
    %v338 = vshrl.u32 %v337, 7
    %v339 = vsub.s32 0, %v338
    %v340 = vrot.slane %v106, %v339
    %v341 = vadd.f32 %v323, %v340
    %v342 = vadd.f32 %v329, %v340
    %v343 = vld [vmem:[#allocation2] sm:$0xff]
    %v344 = vld [vmem:[#allocation2 + $0x8] sm:$0xff]
    %345 = vmatprep.subr.mxu0 0.0
    %346 = vmatpush1.xpose.msra.mxu0 %v335
    %347 = vmatprep.subr.mxu0 0.0
    %348 = vmatpush1.xpose.msra.mxu0 0.0
    %349 = vmatprep.subr.mxu0 0.0
    %350 = vmatpush1.xpose.msra.mxu0 0.0
    %351 = vmatprep.subr.mxu0 0.0
    %352 = vmatpush1.xpose.msra.mxu0 0.0
    %353 = vmatprep.subr.mxu0 0.0
    %354 = vmatpush1.xpose.msra.mxu0 0.0
    %355 = vmatprep.subr.mxu0 0.0
    %356 = vmatpush1.xpose.msra.mxu0 0.0
    %357 = vmatprep.subr.mxu0 0.0
    %358 = vmatpush1.xpose.msra.mxu0 0.0
    %359 = vmatprep.subr.mxu0 0.0
    %360 = vmatpush1.xpose.msra.mxu0 0.0
    %361 = vmatprep.subr.mxu0 0.0
    %362 = vmatpush1.xpose.msra.mxu0 0.0
    %363 = vmatprep.subr.mxu0 0.0
    %364 = vmatpush1.xpose.msra.mxu0 0.0
    %365 = vmatprep.subr.mxu0 0.0
    %366 = vmatpush1.xpose.msra.mxu0 0.0
    %367 = vmatprep.subr.mxu0 0.0
    %368 = vmatpush1.xpose.msra.mxu0 0.0
    %369 = vmatprep.subr.mxu0 0.0
    %370 = vmatpush1.xpose.msra.mxu0 0.0
    %371 = vmatprep.subr.mxu0 0.0
    %372 = vmatpush1.xpose.msra.mxu0 0.0
    %373 = vmatprep.subr.mxu0 0.0
    %374 = vmatpush1.xpose.msra.mxu0 0.0
    %375 = vmatprep.subr.mxu0 0.0
    %376 = vmatpush1.xpose.msra.mxu0 0.0
    %377 = vmatprep.subr.mxu0 0.0
    %378 = vmatpush1.xpose.msra.mxu0 0.0
    %379 = vmatprep.subr.mxu0 0.0
    %380 = vmatpush1.xpose.msra.mxu0 0.0
    %381 = vmatprep.subr.mxu0 0.0
    %382 = vmatpush1.xpose.msra.mxu0 0.0
    %383 = vmatprep.subr.mxu0 0.0
    %384 = vmatpush1.xpose.msra.mxu0 0.0
    %385 = vmatprep.subr.mxu0 0.0
    %386 = vmatpush1.xpose.msra.mxu0 0.0
    %387 = vmatprep.subr.mxu0 0.0
    %388 = vmatpush1.xpose.msra.mxu0 0.0
    %389 = vmatprep.subr.mxu0 0.0
    %390 = vmatpush1.xpose.msra.mxu0 0.0
    %391 = vmatprep.subr.mxu0 0.0
    %392 = vmatpush1.xpose.msra.mxu0 0.0
    %393 = vmatprep.subr.mxu0 0.0
    %394 = vmatpush1.xpose.msra.mxu0 0.0
    %395 = vmatprep.subr.mxu0 0.0
    %396 = vmatpush1.xpose.msra.mxu0 0.0
    %397 = vmatprep.subr.mxu0 0.0
    %398 = vmatpush1.xpose.msra.mxu0 0.0
    %399 = vmatprep.subr.mxu0 0.0
    %400 = vmatpush1.xpose.msra.mxu0 0.0
    %401 = vmatprep.subr.mxu0 0.0
    %402 = vmatpush1.xpose.msra.mxu0 0.0
    %403 = vmatprep.subr.mxu0 0.0
    %404 = vmatpush1.xpose.msra.mxu0 0.0
    %405 = vmatprep.subr.mxu0 0.0
    %406 = vmatpush1.xpose.msra.mxu0 0.0
    %407 = vmatprep.subr.mxu0 0.0
    %408 = vmatpush1.xpose.msra.mxu0 0.0
    %409 = vmatprep.mubr.f32.mxu0 0.0
    %410 = vmatmul.mubr.f32.gmra.mrb[0].mxu0 %v343
    %v411 = vpop.f32.mrb[0].mxu0
    %v412 = vadd.f32 0.0, %v411
    %v413 = vpop.f32.mrb[0].mxu0
    %414 = vdwg.mxu0
    %415 = vmatprep.subr.mxu0 0.0
    %416 = vmatpush1.xpose.msra.mxu0 %v336
    %417 = vmatprep.subr.mxu0 0.0
    %418 = vmatpush1.xpose.msra.mxu0 0.0
    %419 = vmatprep.subr.mxu0 0.0
    %420 = vmatpush1.xpose.msra.mxu0 0.0
    %421 = vmatprep.subr.mxu0 0.0
    %422 = vmatpush1.xpose.msra.mxu0 0.0
    %423 = vmatprep.subr.mxu0 0.0
    %424 = vmatpush1.xpose.msra.mxu0 0.0
    %425 = vmatprep.subr.mxu0 0.0
    %426 = vmatpush1.xpose.msra.mxu0 0.0
    %427 = vmatprep.subr.mxu0 0.0
    %428 = vmatpush1.xpose.msra.mxu0 0.0
    %429 = vmatprep.subr.mxu0 0.0
    %430 = vmatpush1.xpose.msra.mxu0 0.0
    %431 = vmatprep.subr.mxu0 0.0
    %432 = vmatpush1.xpose.msra.mxu0 0.0
    %433 = vmatprep.subr.mxu0 0.0
    %434 = vmatpush1.xpose.msra.mxu0 0.0
    %435 = vmatprep.subr.mxu0 0.0
    %436 = vmatpush1.xpose.msra.mxu0 0.0
    %437 = vmatprep.subr.mxu0 0.0
    %438 = vmatpush1.xpose.msra.mxu0 0.0
    %439 = vmatprep.subr.mxu0 0.0
    %440 = vmatpush1.xpose.msra.mxu0 0.0
    %441 = vmatprep.subr.mxu0 0.0
    %442 = vmatpush1.xpose.msra.mxu0 0.0
    %443 = vmatprep.subr.mxu0 0.0
    %444 = vmatpush1.xpose.msra.mxu0 0.0
    %445 = vmatprep.subr.mxu0 0.0
    %446 = vmatpush1.xpose.msra.mxu0 0.0
    %447 = vmatprep.subr.mxu0 0.0
    %448 = vmatpush1.xpose.msra.mxu0 0.0
    %449 = vmatprep.subr.mxu0 0.0
    %450 = vmatpush1.xpose.msra.mxu0 0.0
    %451 = vmatprep.subr.mxu0 0.0
    %452 = vmatpush1.xpose.msra.mxu0 0.0
    %453 = vmatprep.subr.mxu0 0.0
    %454 = vmatpush1.xpose.msra.mxu0 0.0
    %455 = vmatprep.subr.mxu0 0.0
    %456 = vmatpush1.xpose.msra.mxu0 0.0
    %457 = vmatprep.subr.mxu0 0.0
    %458 = vmatpush1.xpose.msra.mxu0 0.0
    %459 = vmatprep.subr.mxu0 0.0
    %460 = vmatpush1.xpose.msra.mxu0 0.0
    %461 = vmatprep.subr.mxu0 0.0
    %462 = vmatpush1.xpose.msra.mxu0 0.0
    %463 = vmatprep.subr.mxu0 0.0
    %464 = vmatpush1.xpose.msra.mxu0 0.0
    %465 = vmatprep.subr.mxu0 0.0
    %466 = vmatpush1.xpose.msra.mxu0 0.0
    %467 = vmatprep.subr.mxu0 0.0
    %468 = vmatpush1.xpose.msra.mxu0 0.0
    %469 = vmatprep.subr.mxu0 0.0
    %470 = vmatpush1.xpose.msra.mxu0 0.0
    %471 = vmatprep.subr.mxu0 0.0
    %472 = vmatpush1.xpose.msra.mxu0 0.0
    %473 = vmatprep.subr.mxu0 0.0
    %474 = vmatpush1.xpose.msra.mxu0 0.0
    %475 = vmatprep.subr.mxu0 0.0
    %476 = vmatpush1.xpose.msra.mxu0 0.0
    %477 = vmatprep.subr.mxu0 0.0
    %478 = vmatpush1.xpose.msra.mxu0 0.0
    %479 = vmatprep.mubr.f32.mxu0 0.0
    %480 = vmatmul.mubr.f32.gmra.mrb[0].mxu0 %v344
    %v481 = vpop.f32.mrb[0].mxu0
    %v482 = vadd.f32 0.0, %v481
    %v483 = vpop.f32.mrb[0].mxu0
    %484 = vdwg.mxu0
    %v485 = vld [vmem:[#allocation3] sm:$0xff]
    %v486 = vld [vmem:[#allocation3 + $0x8] sm:$0xff]
    %vm487 = vcmask 64512
    %v488 = vsel %vm487, %v412, -inf
    %489 = vmax.xlane.f32.xlu0 %v488
    %v490 = vpop.xlane.xlu0 %489
    %v491 = vsel %vm487, %v482, -inf
    %492 = vmax.xlane.f32.xlu0 %v491
    %v493 = vpop.xlane.xlu0 %492
    %v494 = vmax.f32 %v485, %v490
    %v495 = vmax.f32 %v486, %v493
    %v496 = vsub.f32 %v485, %v494
    %v497 = vsub.f32 %v486, %v495
    %v498 = vmul.f32 %v496, 1.442695
    %v499 = vpow.pop %v498
    %v500 = vmul.f32 %v497, 1.442695
    %v501 = vpow.pop %v500
    %503 = vset.pattern.permute.xlu0 0
    %504 = vperm.xlu0 %503, %v494
    %v505 = vpop.permute.xlu0 %504
    %508 = vset.pattern.permute.xlu0 0
    %509 = vperm.xlu0 %508, %v495
    %v510 = vpop.permute.xlu0 %509
    %v512 = vsub.f32 %v412, %v505
    %v513 = vsub.f32 %v482, %v510
    %v514 = vmul.f32 %v512, 1.442695
    %v515 = vpow.pop %v514
    %v516 = vmul.f32 %v513, 1.442695
    %v517 = vpow.pop %v516
    %v518 = vld [vmem:[#allocation4] sm:$0xff]
    %v519 = vld [vmem:[#allocation4 + $0x8] sm:$0xff]
    %v520 = vmul.f32 %v499, %v518
    %v521 = vmul.f32 %v501, %v519
    %v522 = vsel %vm487, %v515, 0.0
    %523 = vadd.xlane.f32.xlu0 %v522
    %v524 = vpop.xlane.xlu0 %523
    %v525 = vsel %vm487, %v517, 0.0
    %526 = vadd.xlane.f32.xlu0 %v525
    %v527 = vpop.xlane.xlu0 %526
    %v528 = vadd.f32 %v520, %v524
    %v529 = vadd.f32 %v521, %v527
    %vm530 = vcmask 7168
    %531 = vst.msk [vmem:[#allocation4] sm:$0xff] %vm530, %v528
    %532 = vst.msk [vmem:[#allocation4 + $0x8] sm:$0xff] %vm530, %v529
    %v533 = vld [vmem:[#allocation5] sm:$0xff]
    %v534 = vld [vmem:[#allocation5 + $0x8] sm:$0xff]
    %536 = vset.pattern.permute.xlu0 0
    %537 = vperm.xlu0 %536, %v499
    %v538 = vpop.permute.xlu0 %537
    %541 = vset.pattern.permute.xlu0 0
    %542 = vperm.xlu0 %541, %v501
    %v543 = vpop.permute.xlu0 %542
    %v545 = vmul.f32 %v538, %v533
    %v546 = vmul.f32 %v543, %v534
    %v548 = vsel %vm487, %v515, 0
    %550 = vmatprep.subr.mxu0 0.0
    %551 = vmatpush1.msra.mxu0 %v341
    %552 = vmatprep.subr.mxu0 0.0
    %553 = vmatpush1.msra.mxu0 0.0
    %554 = vmatprep.subr.mxu0 0.0
    %555 = vmatpush1.msra.mxu0 0.0
    %556 = vmatprep.subr.mxu0 0.0
    %557 = vmatpush1.msra.mxu0 0.0
    %558 = vmatprep.subr.mxu0 0.0
    %559 = vmatpush1.msra.mxu0 0.0
    %560 = vmatprep.subr.mxu0 0.0
    %561 = vmatpush1.msra.mxu0 0.0
    %562 = vmatprep.subr.mxu0 0.0
    %563 = vmatpush1.msra.mxu0 0.0
    %564 = vmatprep.subr.mxu0 0.0
    %565 = vmatpush1.msra.mxu0 0.0
    %566 = vmatprep.subr.mxu0 0.0
    %567 = vmatpush1.msra.mxu0 0.0
    %568 = vmatprep.subr.mxu0 0.0
    %569 = vmatpush1.msra.mxu0 0.0
    %570 = vmatprep.subr.mxu0 0.0
    %571 = vmatpush1.msra.mxu0 0.0
    %572 = vmatprep.subr.mxu0 0.0
    %573 = vmatpush1.msra.mxu0 0.0
    %574 = vmatprep.subr.mxu0 0.0
    %575 = vmatpush1.msra.mxu0 0.0
    %576 = vmatprep.subr.mxu0 0.0
    %577 = vmatpush1.msra.mxu0 0.0
    %578 = vmatprep.subr.mxu0 0.0
    %579 = vmatpush1.msra.mxu0 0.0
    %580 = vmatprep.subr.mxu0 0.0
    %581 = vmatpush1.msra.mxu0 0.0
    %582 = vmatprep.subr.mxu0 0.0
    %583 = vmatpush1.msra.mxu0 0.0
    %584 = vmatprep.subr.mxu0 0.0
    %585 = vmatpush1.msra.mxu0 0.0
    %586 = vmatprep.subr.mxu0 0.0
    %587 = vmatpush1.msra.mxu0 0.0
    %588 = vmatprep.subr.mxu0 0.0
    %589 = vmatpush1.msra.mxu0 0.0
    %590 = vmatprep.subr.mxu0 0.0
    %591 = vmatpush1.msra.mxu0 0.0
    %592 = vmatprep.subr.mxu0 0.0
    %593 = vmatpush1.msra.mxu0 0.0
    %594 = vmatprep.subr.mxu0 0.0
    %595 = vmatpush1.msra.mxu0 0.0
    %596 = vmatprep.subr.mxu0 0.0
    %597 = vmatpush1.msra.mxu0 0.0
    %598 = vmatprep.subr.mxu0 0.0
    %599 = vmatpush1.msra.mxu0 0.0
    %600 = vmatprep.subr.mxu0 0.0
    %601 = vmatpush1.msra.mxu0 0.0
    %602 = vmatprep.subr.mxu0 0.0
    %603 = vmatpush1.msra.mxu0 0.0
    %604 = vmatprep.subr.mxu0 0.0
    %605 = vmatpush1.msra.mxu0 0.0
    %606 = vmatprep.subr.mxu0 0.0
    %607 = vmatpush1.msra.mxu0 0.0
    %608 = vmatprep.subr.mxu0 0.0
    %609 = vmatpush1.msra.mxu0 0.0
    %610 = vmatprep.subr.mxu0 0.0
    %611 = vmatpush1.msra.mxu0 0.0
    %612 = vmatprep.subr.mxu0 0.0
    %613 = vmatpush1.msra.mxu0 0.0
    %614 = vmatprep.mubr.f32.mxu0 0.0
    %615 = vmatmul.mubr.f32.gmra.mrb[0].mxu0 %v548
    %v616 = vpop.f32.mrb[0].mxu0
    %v617 = vadd.f32 0.0, %v616
    %v618 = vpop.f32.mrb[0].mxu0
    %619 = vdwg.mxu0
    %v621 = vsel %vm487, %v517, 0
    %623 = vmatprep.subr.mxu0 0.0
    %624 = vmatpush1.msra.mxu0 %v342
    %625 = vmatprep.subr.mxu0 0.0
    %626 = vmatpush1.msra.mxu0 0.0
    %627 = vmatprep.subr.mxu0 0.0
    %628 = vmatpush1.msra.mxu0 0.0
    %629 = vmatprep.subr.mxu0 0.0
    %630 = vmatpush1.msra.mxu0 0.0
    %631 = vmatprep.subr.mxu0 0.0
    %632 = vmatpush1.msra.mxu0 0.0
    %633 = vmatprep.subr.mxu0 0.0
    %634 = vmatpush1.msra.mxu0 0.0
    %635 = vmatprep.subr.mxu0 0.0
    %636 = vmatpush1.msra.mxu0 0.0
    %637 = vmatprep.subr.mxu0 0.0
    %638 = vmatpush1.msra.mxu0 0.0
    %639 = vmatprep.subr.mxu0 0.0
    %640 = vmatpush1.msra.mxu0 0.0
    %641 = vmatprep.subr.mxu0 0.0
    %642 = vmatpush1.msra.mxu0 0.0
    %643 = vmatprep.subr.mxu0 0.0
    %644 = vmatpush1.msra.mxu0 0.0
    %645 = vmatprep.subr.mxu0 0.0
    %646 = vmatpush1.msra.mxu0 0.0
    %647 = vmatprep.subr.mxu0 0.0
    %648 = vmatpush1.msra.mxu0 0.0
    %649 = vmatprep.subr.mxu0 0.0
    %650 = vmatpush1.msra.mxu0 0.0
    %651 = vmatprep.subr.mxu0 0.0
    %652 = vmatpush1.msra.mxu0 0.0
    %653 = vmatprep.subr.mxu0 0.0
    %654 = vmatpush1.msra.mxu0 0.0
    %655 = vmatprep.subr.mxu0 0.0
    %656 = vmatpush1.msra.mxu0 0.0
    %657 = vmatprep.subr.mxu0 0.0
    %658 = vmatpush1.msra.mxu0 0.0
    %659 = vmatprep.subr.mxu0 0.0
    %660 = vmatpush1.msra.mxu0 0.0
    %661 = vmatprep.subr.mxu0 0.0
    %662 = vmatpush1.msra.mxu0 0.0
    %663 = vmatprep.subr.mxu0 0.0
    %664 = vmatpush1.msra.mxu0 0.0
    %665 = vmatprep.subr.mxu0 0.0
    %666 = vmatpush1.msra.mxu0 0.0
    %667 = vmatprep.subr.mxu0 0.0
    %668 = vmatpush1.msra.mxu0 0.0
    %669 = vmatprep.subr.mxu0 0.0
    %670 = vmatpush1.msra.mxu0 0.0
    %671 = vmatprep.subr.mxu0 0.0
    %672 = vmatpush1.msra.mxu0 0.0
    %673 = vmatprep.subr.mxu0 0.0
    %674 = vmatpush1.msra.mxu0 0.0
    %675 = vmatprep.subr.mxu0 0.0
    %676 = vmatpush1.msra.mxu0 0.0
    %677 = vmatprep.subr.mxu0 0.0
    %678 = vmatpush1.msra.mxu0 0.0
    %679 = vmatprep.subr.mxu0 0.0
    %680 = vmatpush1.msra.mxu0 0.0
    %681 = vmatprep.subr.mxu0 0.0
    %682 = vmatpush1.msra.mxu0 0.0
    %683 = vmatprep.subr.mxu0 0.0
    %684 = vmatpush1.msra.mxu0 0.0
    %685 = vmatprep.subr.mxu0 0.0
    %686 = vmatpush1.msra.mxu0 0.0
    %687 = vmatprep.mubr.f32.mxu0 0.0
    %688 = vmatmul.mubr.f32.gmra.mrb[0].mxu0 %v621
    %v689 = vpop.f32.mrb[0].mxu0
    %v690 = vadd.f32 0.0, %v689
    %v691 = vpop.f32.mrb[0].mxu0
    %692 = vdwg.mxu0
    %v693 = vadd.f32 %v545, %v617
    %v694 = vadd.f32 %v546, %v690
    %695 = vst [vmem:[#allocation5] sm:$0xff] %v693
    %696 = vst [vmem:[#allocation5 + $0x8] sm:$0xff] %v694
    %697 = vst.msk [vmem:[#allocation3] sm:$0xff] %vm530, %v494
    %698 = vst.msk [vmem:[#allocation3 + $0x8] sm:$0xff] %vm530, %v495
    // Predicated region
    $region54: #{tpu_custom_call.1} parent=1 // pred_check
      %p699 = pneg %p110
    $region55: #{tpu_custom_call.1} parent=1 // pred_check_branch
      %701 = sbr.rel (%p699) target = $region57
    $region56: #{tpu_custom_call.1} parent=1 // pred_region
      %v702 = vld [vmem:[#allocation4] sm:$0xff]
      %v703 = vld [vmem:[#allocation4 + $0x8] sm:$0xff]
      %v704 = vrcp.pop %v702
      %v705 = vmul.f32 1.0, %v704
      %v706 = vrcp.pop %v703
      %v707 = vmul.f32 1.0, %v706
      %v708 = vld [vmem:[#allocation5] sm:$0xff]
      %v709 = vld [vmem:[#allocation5 + $0x8] sm:$0xff]
      %711 = vset.pattern.permute.xlu0 0
      %712 = vperm.xlu0 %711, %v705
      %v713 = vpop.permute.xlu0 %712
      %716 = vset.pattern.permute.xlu0 0
      %717 = vperm.xlu0 %716, %v707
      %v718 = vpop.permute.xlu0 %717
      %v720 = vmul.f32 %v708, %v713
      %v721 = vmul.f32 %v709, %v718
      %v722 = vld [vmem:[#allocation14] sm:$0xff]
      %v723 = vld [vmem:[#allocation14 + $0x8] sm:$0xff]
      %v724 = vld [vmem:[#allocation14 + $0x10] sm:$0xff]
      %v725 = vld [vmem:[#allocation14 + $0x18] sm:$0xff]
      %v726 = vld [vmem:[#allocation14 + $0x20] sm:$0xff]
      %v727 = vld [vmem:[#allocation14 + $0x28] sm:$0xff]
      %v728 = vld [vmem:[#allocation14 + $0x30] sm:$0xff]
      %v729 = vld [vmem:[#allocation14 + $0x38] sm:$0xff]
      %v730 = vld [vmem:[#allocation14 + $0x40] sm:$0xff]
      %v731 = vld [vmem:[#allocation14 + $0x48] sm:$0xff]
      %v732 = vld [vmem:[#allocation14 + $0x50] sm:$0xff]
      %v733 = vld [vmem:[#allocation14 + $0x58] sm:$0xff]
      %v734 = vld [vmem:[#allocation14 + $0x60] sm:$0xff]
      %v735 = vld [vmem:[#allocation14 + $0x68] sm:$0xff]
      %v736 = vld [vmem:[#allocation14 + $0x70] sm:$0xff]
      %v737 = vld [vmem:[#allocation14 + $0x78] sm:$0xff]
      %v738 = vlaneseq
      %v739 = vshrl.u32 %v738, 7
      %v740 = vsub.s32 0, %v739
      %v741 = vrot.slane %v107, %v740
      %742 = vmatprep.subr.mxu0 0.0
      %743 = vmatpush1.msra.mxu0 %v722
      %744 = vmatprep.subr.mxu0 0.0
      %745 = vmatpush1.msra.mxu0 %v723
      %746 = vmatprep.subr.mxu0 0.0
      %747 = vmatpush1.msra.mxu0 %v724
      %748 = vmatprep.subr.mxu0 0.0
      %749 = vmatpush1.msra.mxu0 %v725
      %750 = vmatprep.subr.mxu0 0.0
      %751 = vmatpush1.msra.mxu0 %v726
      %752 = vmatprep.subr.mxu0 0.0
      %753 = vmatpush1.msra.mxu0 %v727
      %754 = vmatprep.subr.mxu0 0.0
      %755 = vmatpush1.msra.mxu0 %v728
      %756 = vmatprep.subr.mxu0 0.0
      %757 = vmatpush1.msra.mxu0 %v729
      %758 = vmatprep.subr.mxu0 0.0
      %759 = vmatpush1.msra.mxu0 %v730
      %760 = vmatprep.subr.mxu0 0.0
      %761 = vmatpush1.msra.mxu0 %v731
      %762 = vmatprep.subr.mxu0 0.0
      %763 = vmatpush1.msra.mxu0 %v732
      %764 = vmatprep.subr.mxu0 0.0
      %765 = vmatpush1.msra.mxu0 %v733
      %766 = vmatprep.subr.mxu0 0.0
      %767 = vmatpush1.msra.mxu0 %v734
      %768 = vmatprep.subr.mxu0 0.0
      %769 = vmatpush1.msra.mxu0 %v735
      %770 = vmatprep.subr.mxu0 0.0
      %771 = vmatpush1.msra.mxu0 %v736
      %772 = vmatprep.subr.mxu0 0.0
      %773 = vmatpush1.msra.mxu0 %v737
      %774 = vmatprep.subr.mxu0 0.0
      %775 = vmatpush1.msra.mxu0 0.0
      %776 = vmatprep.subr.mxu0 0.0
      %777 = vmatpush1.msra.mxu0 0.0
      %778 = vmatprep.subr.mxu0 0.0
      %779 = vmatpush1.msra.mxu0 0.0
      %780 = vmatprep.subr.mxu0 0.0
      %781 = vmatpush1.msra.mxu0 0.0
      %782 = vmatprep.subr.mxu0 0.0
      %783 = vmatpush1.msra.mxu0 0.0
      %784 = vmatprep.subr.mxu0 0.0
      %785 = vmatpush1.msra.mxu0 0.0
      %786 = vmatprep.subr.mxu0 0.0
      %787 = vmatpush1.msra.mxu0 0.0
      %788 = vmatprep.subr.mxu0 0.0
      %789 = vmatpush1.msra.mxu0 0.0
      %790 = vmatprep.subr.mxu0 0.0
      %791 = vmatpush1.msra.mxu0 0.0
      %792 = vmatprep.subr.mxu0 0.0
      %793 = vmatpush1.msra.mxu0 0.0
      %794 = vmatprep.subr.mxu0 0.0
      %795 = vmatpush1.msra.mxu0 0.0
      %796 = vmatprep.subr.mxu0 0.0
      %797 = vmatpush1.msra.mxu0 0.0
      %798 = vmatprep.subr.mxu0 0.0
      %799 = vmatpush1.msra.mxu0 0.0
      %800 = vmatprep.subr.mxu0 0.0
      %801 = vmatpush1.msra.mxu0 0.0
      %802 = vmatprep.subr.mxu0 0.0
      %803 = vmatpush1.msra.mxu0 0.0
      %804 = vmatprep.subr.mxu0 0.0
      %805 = vmatpush1.msra.mxu0 0.0
      %806 = vmatprep.mubr.f32.mxu0 0.0
      %807 = vmatmul.mubr.f32.gmra.mrb[0].mxu0 %v720
      %v808 = vpop.f32.mrb[0].mxu0
      %v809 = vadd.f32 %v741, %v808
      %v810 = vpop.f32.mrb[0].mxu0
      %811 = vmatprep.mubr.f32.mxu0 0.0
      %812 = vmatmul.mubr.f32.gmra.mrb[0].mxu0 %v721
      %v813 = vpop.f32.mrb[0].mxu0
      %v814 = vadd.f32 %v741, %v813
      %v815 = vpop.f32.mrb[0].mxu0
      %816 = vdwg.mxu0
      %v817 = vld [vmem:[#allocation6] sm:$0xff]
      %v818 = vld [vmem:[#allocation6 + $0x8] sm:$0xff]
      %v819 = vadd.f32 %v817, %v809
      %v820 = vadd.f32 %v818, %v814
      %821 = vadd.xlane.f32.xlu0 %v819
      %v822 = vpop.xlane.xlu0 %821
      %823 = vadd.xlane.f32.xlu0 %v820
      %v824 = vpop.xlane.xlu0 %823
      %v825 = vrcp.pop 128.0
      %v826 = vmul.f32 %v822, %v825
      %v827 = vmul.f32 %v824, %v825
      %v828 = vsub.f32 %v819, %v826
      %v829 = vsub.f32 %v820, %v827
      %v830 = vmul.f32 %v828, %v828
      %v831 = vmul.f32 %v829, %v829
      %832 = vadd.xlane.f32.xlu0 %v830
      %v833 = vpop.xlane.xlu0 %832
      %834 = vadd.xlane.f32.xlu0 %v831
      %v835 = vpop.xlane.xlu0 %834
      %v836 = vmul.f32 %v833, %v825
      %v837 = vmul.f32 %v835, %v825
      %v838 = vadd.f32 %v836, 1e-05
      %v839 = vadd.f32 %v837, 1e-05
      %v840 = vrsqrt.pop %v838
      %v841 = vrsqrt.pop %v839
      %v842 = vmul.f32 %v828, %v840
      %v843 = vmul.f32 %v829, %v841
      %v844 = vlaneseq
      %v845 = vshrl.u32 %v844, 7
      %v846 = vsub.s32 0, %v845
      %v847 = vrot.slane %v108, %v846
      %v848 = vmul.f32 %v842, %v847
      %v849 = vmul.f32 %v843, %v847
      %v850 = vlaneseq
      %v851 = vshrl.u32 %v850, 7
      %v852 = vsub.s32 0, %v851
      %v853 = vrot.slane %v109, %v852
      %v854 = vadd.f32 %v848, %v853
      %v855 = vadd.f32 %v849, %v853
      %856 = vst [vmem:[#allocation17] sm:$0xff] %v854
      %857 = vst [vmem:[#allocation17 + $0x8] sm:$0xff] %v855
    $region57: #{tpu_custom_call.1} parent=1 // pred_fallthru
      _
    // Predicated region
    $region58: #{tpu_custom_call.1} parent=1 // pred_check
      _
    $region59: #{tpu_custom_call.1} parent=1 // pred_check_branch
      %859 = sbr.rel (0) target = $region61
    $region60: #{tpu_custom_call.1} parent=1 // pred_region
      %s861 = ssub.s32 256, 256
      %862 = vsyncadd [#allocation8], %s861
      %s863 = sshll.u32 [#allocation17], 4
      %s864 = int_to_ptr.vmem [resolvable:$true] %s863
      %869 = dma.vmem_to_hbm [thread:$0]  %s864, 256, %s6, [#allocation8], 128, 128, 8
    $region61: #{tpu_custom_call.1} parent=1 // pred_fallthru
      _
    // Predicated region
    $region62: #{tpu_custom_call.1} parent=1 // pred_check
      _
    $region63: #{tpu_custom_call.1} parent=1 // pred_check_branch
      %871 = sbr.rel (0) target = $region65
    $region64: #{tpu_custom_call.1} parent=1 // pred_region
      %872 = dma.done [#allocation8], 256
    $region65: #{tpu_custom_call.1} parent=1 // pred_fallthru
      _
    %873 = vsyncpa [#allocation7], 1
    %874 = vsyncpa [#allocation10], 1
    %875 = vsyncpa [#allocation13], 1
    %876 = vsyncpa [#allocation16], 1
    %877 = vsyncpa [#allocation8], 1

</llo_original>
